<compile_context>
chip_gen: v6e
topology: v6e:2x2x1
jax: 0.10.0
libtpu: 0.0.40
codegen_flags: <defaults>
</compile_context>

<pallas_src>
import functools

import jax
import jax.numpy as jnp
from jax.experimental import pallas as pl
from jax.experimental.pallas import tpu as pltpu


# ---------------------------------------------------------------------------
# Kernels (one grid step handles a (TB, S, D) slab of the batch)
# ---------------------------------------------------------------------------

def _mean_kernel(gamma, id_ref, seq_ref, wv_t_ref, out_ref):
    seq = seq_ref[...]                                    # (TB, S, D) native dtype
    idv = id_ref[...].astype(jnp.float32)                 # (TB, D)
    wv_t = wv_t_ref[...]                                  # (D, D) pre-cast (in, out)

    valid = (jnp.sum(seq, axis=-1) != 0).astype(jnp.float32)     # (TB, S)
    denom = jnp.sum(valid, axis=-1, keepdims=True) + 1e-12       # (TB, 1)
    # Exact division on the tiny normalizer (bit-closer parity with PyTorch).
    mean = jnp.sum(seq, axis=1).astype(jnp.float32) / denom      # (TB, D)

    pooled = jnp.dot(mean.astype(wv_t.dtype), wv_t,
                     preferred_element_type=jnp.float32)         # W_v(mean)
    out_ref[...] = (gamma * idv + (1.0 - gamma) * pooled).astype(out_ref.dtype)


def _attention_core(gamma, seq, attn, mask, idv, wv_t, out_ref):
    """Shared masked-softmax + weighted-sum + W_v + gamma blend."""
    # masked_softmax: masked logits set to 0 BEFORE exp (exp(0)=1), exactly
    # matching the PyTorch reference.  NOTE: the reference has no running-max
    # subtraction, so very large logits can overflow exp; reproduced as-is.
    attn = jnp.where(mask, 0.0, attn)
    e = jnp.exp(attn)
    w = e / (jnp.sum(e, axis=1, keepdims=True) + 1e-12)           # (TB, S) f32

    # output = bmm(attention.unsqueeze(1), sequence_emb).squeeze(1)
    # -> VPU multiply (promotes to f32) + sublane reduce; no tiny MXU matmuls.
    pooled = jnp.sum(w[:, :, None] * seq, axis=1)                 # (TB, D) f32
    pooled = jnp.dot(pooled.astype(wv_t.dtype), wv_t,
                     preferred_element_type=jnp.float32)          # W_v
    out_ref[...] = (gamma * idv + (1.0 - gamma) * pooled).astype(out_ref.dtype)


def _cross_attn_kernel(gamma, id_ref, seq_ref, wk_t_ref, bk_ref, wv_t_ref,
                       out_ref):
    seq = seq_ref[...]                                    # (TB, S, D) native dtype
    idv = id_ref[...].astype(jnp.float32)                 # (TB, D)
    wk_t = wk_t_ref[...]                                  # (D, D) pre-cast
    bk = bk_ref[...]                                      # (1, D) f32
    wv_t = wv_t_ref[...]                                  # (D, D) pre-cast

    tb, s, d = seq.shape
    # key = tanh(seq @ W_k.T + b_k) as ONE flattened (TB*S, D) MXU matmul fed
    # in the native dtype (f32 accumulate).  For lane-aligned D (mult of 128)
    # and S a multiple of 8 these reshapes are layout no-ops.
    key = jnp.tanh(
        jnp.dot(seq.reshape(tb * s, d), wk_t,
                preferred_element_type=jnp.float32) + bk
    ).reshape(tb, s, d)

    mask = jnp.sum(seq, axis=-1) == 0                             # (TB, S)
    # attention = bmm(key, id_emb.unsqueeze(-1)) -> VPU mult + lane reduce.
    attn = jnp.sum(key * idv[:, None, :], axis=-1)                # (TB, S)

    _attention_core(gamma, seq, attn, mask, idv, wv_t, out_ref)


def _self_attn_kernel(gamma, id_ref, seq_ref, wk_t_ref, bk_ref, wq_ref,
                      wv_t_ref, out_ref):
    seq = seq_ref[...]                                    # (TB, S, D) native dtype
    idv = id_ref[...].astype(jnp.float32)                 # (TB, D)
    wk_t = wk_t_ref[...]                                  # (D, D) pre-cast
    bk = bk_ref[...]                                      # (1, D) f32
    wq = wq_ref[...]                                      # (1, D) f32 (W_q row)
    wv_t = wv_t_ref[...]                                  # (D, D) pre-cast

    tb, s, d = seq.shape
    key = jnp.tanh(
        jnp.dot(seq.reshape(tb * s, d), wk_t,
                preferred_element_type=jnp.float32) + bk
    ).reshape(tb, s, d)

    mask = jnp.sum(seq, axis=-1) == 0                             # (TB, S)
    # attention = (key @ W_q).squeeze(-1) -> VPU mult + lane reduce.
    attn = jnp.sum(key * wq.reshape(1, 1, d), axis=-1)            # (TB, S)

    _attention_core(gamma, seq, attn, mask, idv, wv_t, out_ref)


# ---------------------------------------------------------------------------
# Wrapper
# ---------------------------------------------------------------------------

def _round_up(x, m):
    return ((x + m - 1) // m) * m


def _chip_info():
    """(physical VMEM bytes per core, tensorcores per chip) with safe fallbacks."""
    vmem = 64 << 20
    cores = None
    try:
        info = pltpu.get_tpu_info()
        vmem = int(getattr(info, "vmem_capacity_bytes", vmem) or vmem)
        cores = (getattr(info, "num_cores", None)
                 or getattr(info, "cores_per_chip", None))
    except Exception:
        pass
    if not cores:
        try:
            cores = getattr(jax.devices()[0], "num_cores", None)
        except Exception:
            cores = None
    if not cores:
        # Heuristic: only v7x-class parts expose <=64 MiB VMEM per TensorCore.
        cores = 2 if vmem <= (64 << 20) else 1
    return vmem, int(cores)


def _choose_tb(B, S, D, ebytes, block_budget, cores):
    """Batch tile: fits the VMEM budget, prefers a multiple-of-8 divisor of B
    (no jnp.pad), and leaves >=2 grid steps on 2-TensorCore chips."""
    # Per batch row: double-buffered streamed blocks (native dtype) plus the
    # f32 in-kernel intermediates (key, weighted product, small vectors).
    per_row = 2 * ebytes * (S * D + 2 * D) + 4 * (2 * S * D + 8 * D + 4 * S)
    cap = max(8, int(block_budget) // max(per_row, 1))
    cap = min(cap, 2048)
    if cores >= 2:
        half = max(8, ((B + 1) // 2 // 8) * 8)
        cap = min(cap, half)       # guarantee >=2 steps so both cores work

    t = min((cap // 8) * 8, _round_up(B, 8))
    while t >= 8:
        if B % t == 0:
            return t                       # aligned divisor -> no padding
        t -= 8
    if B <= cap:
        return B                           # single full-extent block (grid=1)
    return max(8, (cap // 8) * 8)          # fallback (requires padding)


def behavior_aggregator(id_emb, sequence_emb, params, *, aggregator="mean",
                        gamma=0.5, block_b=None):
    """Pallas implementation of BehaviorAggregator.forward.

    id_emb:       (B, D)
    sequence_emb: (B, S, D)
    params: dict with keys:
        'W_v' : (D, D)                      always
        'W_k' : (D, D), 'b_k' : (D,)        for *_attention
        'W_q' : (D, 1)                      for self_attention
    """
    B, D = id_emb.shape
    _, S, _ = sequence_emb.shape
    g = float(gamma)

    if aggregator not in ("mean", "cross_attention", "self_attention"):
        # out = id_emb -> blend with itself (matches the reference exactly).
        return (g * id_emb + (1.0 - g) * id_emb).astype(id_emb.dtype)

    ebytes = jnp.dtype(sequence_emb.dtype).itemsize
    vmem, cores = _chip_info()
    # Generation-aware scoped-VMEM ceiling: ~64 MiB on 128 MiB parts
    # (v5e/v6e), ~32 MiB on 64 MiB parts (v7x).
    scoped_cap = min(max(vmem // 2, 16 << 20), 100 << 20)
    weight_bytes = 4 * (2 * D * D + 2 * D)
    block_budget = max(scoped_cap - 2 * weight_bytes - (4 << 20), 4 << 20)

    if block_b is None:
        tb = _choose_tb(B, S, D, ebytes, block_budget, cores)
    else:
        tb = max(8, (int(block_b) // 8) * 8) if B >= 8 else B

    Bp = _round_up(B, tb)
    if Bp != B:
        # TODO(synk): padding fallback only (B has no usable multiple-of-8
        # divisor under the VMEM cap); this is an extra HBM copy of the
        # largest tensor. Padded rows produce finite values sliced off below.
        id_p = jnp.pad(id_emb, ((0, Bp - B), (0, 0)))
        seq_p = jnp.pad(sequence_emb, ((0, Bp - B), (0, 0), (0, 0)))
    else:
        id_p, seq_p = id_emb, sequence_emb

    grid = (Bp // tb,)
    id_spec = pl.BlockSpec((tb, D), lambda i: (i, 0))
    seq_spec = pl.BlockSpec((tb, S, D), lambda i: (i, 0, 0))
    out_spec = pl.BlockSpec((tb, D), lambda i: (i, 0))
    out_shape = jax.ShapeDtypeStruct((Bp, D), id_emb.dtype)

    cparams = pltpu.CompilerParams(
        dimension_semantics=("parallel",),   # megacore sharding on 2-TC parts
        vmem_limit_bytes=int(scoped_cap),
    )

    # Pre-transpose / pre-cast weights ONCE in the wrapper (PyTorch Linear is
    # (out, in)); kernels consume them with no per-step relayout or cast.
    cdt = sequence_emb.dtype
    wv_t = params["W_v"].T.astype(cdt)
    wk_t = b_k = w_q = None
    if aggregator in ("cross_attention", "self_attention"):
        wk_t = params["W_k"].T.astype(cdt)
        b_k = params["b_k"].reshape(1, D).astype(jnp.float32)
        if aggregator == "self_attention":
            w_q = params["W_q"].T.astype(jnp.float32)   # (D,1) -> lane-dense (1,D)

    # Advisory cost estimate so XLA schedules/overlaps the call sensibly.
    if aggregator == "mean":
        flops = B * S * D + 2 * B * D * D + 4 * B * D
        trans = 0
        w_elems = D * D
    else:
        flops = 2 * B * S * D * D + 2 * B * D * D + 6 * B * S * D
        trans = B * S * D + B * S
        w_elems = 2 * D * D + 2 * D
    cost = pl.CostEstimate(
        flops=int(flops),
        transcendentals=int(trans),
        bytes_accessed=int((B * S * D + 2 * B * D) * ebytes + w_elems * ebytes))

    def _launch(single_buffer_weights):
        # Weights/bias have a constant index_map (never re-fetched): single-
        # buffer them so the saved VMEM can go to a bigger batch tile.
        kw = {"pipeline_mode": pl.Buffered(1)} if single_buffer_weights else {}
        w_spec = pl.BlockSpec((D, D), lambda i: (0, 0), **kw)
        b_spec = pl.BlockSpec((1, D), lambda i: (0, 0), **kw)
        common = dict(grid=grid, out_specs=out_spec, out_shape=out_shape,
                      compiler_params=cparams, cost_estimate=cost)
        if aggregator == "mean":
            return pl.pallas_call(
                functools.partial(_mean_kernel, g),
                in_specs=[id_spec, seq_spec, w_spec], **common,
            )(id_p, seq_p, wv_t)
        if aggregator == "cross_attention":
            return pl.pallas_call(
                functools.partial(_cross_attn_kernel, g),
                in_specs=[id_spec, seq_spec, w_spec, b_spec, w_spec], **common,
            )(id_p, seq_p, wk_t, b_k, wv_t)
        return pl.pallas_call(
            functools.partial(_self_attn_kernel, g),
            in_specs=[id_spec, seq_spec, w_spec, b_spec, b_spec, w_spec], **common,
        )(id_p, seq_p, wk_t, b_k, w_q, wv_t)

    try:
        out = _launch(True)
    except Exception:
        # Some Pallas builds may reject pipeline_mode on constant blocks;
        # double-buffered weights are still correct (just slightly more VMEM).
        out = _launch(False)

    return out[:B] if Bp != B else out


# ---------------------------------------------------------------------------
# Pure-JAX reference (for a quick self-check)
# ---------------------------------------------------------------------------

def _reference(id_emb, seq, params, aggregator, gamma):
    def masked_softmax(x, mask):
        x = jnp.where(mask, 0.0, x)
        e = jnp.exp(x)
        return e / (jnp.sum(e, axis=1, keepdims=True) + 1e-12)

    if aggregator == "mean":
        mask = (jnp.sum(seq, axis=-1) != 0).astype(jnp.float32)
        mean = jnp.sum(seq, axis=1) / (jnp.sum(mask, -1, keepdims=True) + 1e-12)
        out = mean @ params["W_v"].T
    elif aggregator == "cross_attention":
        key = jnp.tanh(seq @ params["W_k"].T + params["b_k"])
        mask = jnp.sum(seq, axis=-1) == 0
        attn = jnp.einsum("bse,be->bs", key, id_emb)
        attn = masked_softmax(attn, mask)
        out = jnp.einsum("bs,bsd->bd", attn, seq) @ params["W_v"].T
    else:  # self_attention
        key = jnp.tanh(seq @ params["W_k"].T + params["b_k"])
        mask = jnp.sum(seq, axis=-1) == 0
        attn = (key @ params["W_q"])[..., 0]
        attn = masked_softmax(attn, mask)
        out = jnp.einsum("bs,bsd->bd", attn, seq) @ params["W_v"].T
    return gamma * id_emb + (1.0 - gamma) * out


# ---------------------------------------------------------------------------
# Main
# ---------------------------------------------------------------------------

if __name__ == "__main__":
    B, S, D = 16, 8, 32
    gamma = 0.5

    key = jax.random.PRNGKey(0)
    k_id, k_seq, k_wv, k_wk, k_bk, k_wq = jax.random.split(key, 6)

    id_emb = jax.random.normal(k_id, (B, D), dtype=jnp.float32)
    sequence_emb = jax.random.normal(k_seq, (B, S, D), dtype=jnp.float32)
    # Zero out some sequence positions so the padding-mask path is exercised.
    sequence_emb = sequence_emb.at[0, 5:].set(0.0)
    sequence_emb = sequence_emb.at[3, 7:].set(0.0)
    sequence_emb = sequence_emb.at[9, 2:].set(0.0)

    params = {
        "W_v": jax.random.normal(k_wv, (D, D), dtype=jnp.float32) * 0.1,
        "W_k": jax.random.normal(k_wk, (D, D), dtype=jnp.float32) * 0.1,
        "b_k": jax.random.normal(k_bk, (D,), dtype=jnp.float32) * 0.1,
        "W_q": jax.random.normal(k_wq, (D, 1), dtype=jnp.float32) * 0.1,
    }

    ok = True
    for agg in ("mean", "cross_attention", "self_attention"):
        ref = _reference(id_emb, sequence_emb, params, agg, gamma)
        for tb in (None, 8):   # auto tile and an explicit 2-step grid
            out = behavior_aggregator(id_emb, sequence_emb, params,
                                      aggregator=agg, gamma=gamma, block_b=tb)
            out = jax.block_until_ready(out)
            # tolerance covers EUP tanh/exp vs XLA transcendental differences.
            if not jnp.allclose(out, ref, atol=1e-3, rtol=1e-3):
                ok = False
                print(f"mismatch for aggregator={agg} block_b={tb}")

    if ok:
        print("KERNEL_OK")
</pallas_src>

<mosaic_0001>
module attributes {stable_mosaic.version = 11 : i64} {
  func.func @_mean_kernel(%arg0: i32, %arg1: memref<8x32xf32, #tpu.memory_space<vmem>>, %arg2: memref<8x8x32xf32, #tpu.memory_space<vmem>>, %arg3: memref<32x32xf32, #tpu.memory_space<vmem>>, %arg4: memref<8x32xf32, #tpu.memory_space<vmem>>) attributes {dimension_semantics = [#tpu.dimension_semantics<parallel>], iteration_bounds = array<i64: 2>, scalar_prefetch = 0 : i64, scratch_operands = 0 : i64, tpu.core_type = #tpu.core_type<tc>, window_params = [{transform_indices = @transform_0, window_bounds = array<i64: 8, 32>}, {transform_indices = @transform_1, window_bounds = array<i64: 8, 8, 32>}, {pipeline_mode = #tpu.pipeline_mode<synchronous>, transform_indices = @transform_2, window_bounds = array<i64: 32, 32>}, {transform_indices = @transform_3, window_bounds = array<i64: 8, 32>}]} {
    %c0 = arith.constant 0 : index
    %c0_0 = arith.constant 0 : index
    %c0_1 = arith.constant 0 : index
    %0 = vector.load %arg2[%c0, %c0_0, %c0_1] : memref<8x8x32xf32, #tpu.memory_space<vmem>>, vector<8x8x32xf32>
    %c0_2 = arith.constant 0 : index
    %c0_3 = arith.constant 0 : index
    %1 = vector.load %arg1[%c0_2, %c0_3] : memref<8x32xf32, #tpu.memory_space<vmem>>, vector<8x32xf32>
    %c0_4 = arith.constant 0 : index
    %c0_5 = arith.constant 0 : index
    %2 = vector.load %arg3[%c0_4, %c0_5] : memref<32x32xf32, #tpu.memory_space<vmem>>, vector<32x32xf32>
    %cst = arith.constant dense<0.000000e+00> : vector<8x8xf32>
    %3 = vector.multi_reduction <add>, %0, %cst [2] : vector<8x8x32xf32> to vector<8x8xf32>
    %cst_6 = arith.constant 0.000000e+00 : f32
    %4 = vector.broadcast %cst_6 : f32 to vector<8x8xf32>
    %5 = arith.cmpf one, %3, %4 : vector<8x8xf32>
    %6 = arith.extui %5 : vector<8x8xi1> to vector<8x8xi32>
    %7 = arith.sitofp %6 : vector<8x8xi32> to vector<8x8xf32>
    %cst_7 = arith.constant dense<0.000000e+00> : vector<8xf32>
    %8 = vector.multi_reduction <add>, %7, %cst_7 [1] : vector<8x8xf32> to vector<8xf32>
    %9 = vector.shape_cast %8 : vector<8xf32> to vector<8x1xf32>
    %cst_8 = arith.constant 9.99999996E-13 : f32
    %10 = vector.broadcast %cst_8 : f32 to vector<8x1xf32>
    %11 = arith.addf %9, %10 : vector<8x1xf32>
    %cst_9 = arith.constant dense<0.000000e+00> : vector<8x32xf32>
    %12 = vector.multi_reduction <add>, %0, %cst_9 [1] : vector<8x8x32xf32> to vector<8x32xf32>
    %13 = vector.broadcast %11 : vector<8x1xf32> to vector<8x32xf32>
    %14 = arith.divf %12, %13 : vector<8x32xf32>
    %cst_10 = arith.constant dense<0.000000e+00> : vector<8x32xf32>
    %15 = tpu.matmul %14, %2, %cst_10 {dimension_numbers = #tpu.dot_dimension_numbers<[1], [0], [0], [1], [0, 0, 1, 1], [], []>} : vector<8x32xf32>, vector<32x32xf32>, vector<8x32xf32> -> vector<8x32xf32>
    %cst_11 = arith.constant 5.000000e-01 : f32
    %16 = vector.broadcast %cst_11 : f32 to vector<8x32xf32>
    %17 = arith.mulf %16, %1 : vector<8x32xf32>
    %cst_12 = arith.constant 5.000000e-01 : f32
    %18 = vector.broadcast %cst_12 : f32 to vector<8x32xf32>
    %19 = arith.mulf %18, %15 : vector<8x32xf32>
    %20 = arith.addf %17, %19 : vector<8x32xf32>
    %c0_13 = arith.constant 0 : index
    %c0_14 = arith.constant 0 : index
    %21 = vector.load %arg4[%c0_13, %c0_14] : memref<8x32xf32, #tpu.memory_space<vmem>>, vector<8x32xf32>
    tpu.vector_store %arg4[%c0_13, %c0_14], %20 {strides = array<i32>} : memref<8x32xf32, #tpu.memory_space<vmem>>, vector<8x32xf32>,
    return
  }
  func.func @transform_0(%arg0: i32) -> (i32, i32) {
    %c0_i32 = arith.constant 0 : i32
    %c0_i32_0 = arith.constant 0 : i32
    return %arg0, %c0_i32 : i32, i32
  }
  func.func @transform_1(%arg0: i32) -> (i32, i32, i32) {
    %c0_i32 = arith.constant 0 : i32
    %c0_i32_0 = arith.constant 0 : i32
    %c0_i32_1 = arith.constant 0 : i32
    return %arg0, %c0_i32, %c0_i32_0 : i32, i32, i32
  }
  func.func @transform_2(%arg0: i32) -> (i32, i32) {
    %c0_i32 = arith.constant 0 : i32
    %c0_i32_0 = arith.constant 0 : i32
    %c0_i32_1 = arith.constant 0 : i32
    return %c0_i32, %c0_i32_0 : i32, i32
  }
  func.func @transform_3(%arg0: i32) -> (i32, i32) {
    %c0_i32 = arith.constant 0 : i32
    %c0_i32_0 = arith.constant 0 : i32
    return %arg0, %c0_i32 : i32, i32
  }
}

module attributes {stable_mosaic.version = 11 : i64} {
  func.func @_mean_kernel(%arg0: i32, %arg1: memref<8x32xf32, #tpu.memory_space<vmem>>, %arg2: memref<8x8x32xf32, #tpu.memory_space<vmem>>, %arg3: memref<32x32xf32, #tpu.memory_space<vmem>>, %arg4: memref<8x32xf32, #tpu.memory_space<vmem>>) attributes {dimension_semantics = [#tpu.dimension_semantics<parallel>], iteration_bounds = array<i64: 2>, scalar_prefetch = 0 : i64, scratch_operands = 0 : i64, tpu.core_type = #tpu.core_type<tc>, window_params = [{transform_indices = @transform_0, window_bounds = array<i64: 8, 32>}, {transform_indices = @transform_1, window_bounds = array<i64: 8, 8, 32>}, {pipeline_mode = #tpu.pipeline_mode<synchronous>, transform_indices = @transform_2, window_bounds = array<i64: 32, 32>}, {transform_indices = @transform_3, window_bounds = array<i64: 8, 32>}]} {
    %c0 = arith.constant 0 : index
    %c0_0 = arith.constant 0 : index
    %c0_1 = arith.constant 0 : index
    %0 = vector.load %arg2[%c0, %c0_0, %c0_1] : memref<8x8x32xf32, #tpu.memory_space<vmem>>, vector<8x8x32xf32>
    %c0_2 = arith.constant 0 : index
    %c0_3 = arith.constant 0 : index
    %1 = vector.load %arg1[%c0_2, %c0_3] : memref<8x32xf32, #tpu.memory_space<vmem>>, vector<8x32xf32>
    %c0_4 = arith.constant 0 : index
    %c0_5 = arith.constant 0 : index
    %2 = vector.load %arg3[%c0_4, %c0_5] : memref<32x32xf32, #tpu.memory_space<vmem>>, vector<32x32xf32>
    %cst = arith.constant dense<0.000000e+00> : vector<8x8xf32>
    %3 = vector.multi_reduction <add>, %0, %cst [2] : vector<8x8x32xf32> to vector<8x8xf32>
    %cst_6 = arith.constant 0.000000e+00 : f32
    %4 = vector.broadcast %cst_6 : f32 to vector<8x8xf32>
    %5 = arith.cmpf one, %3, %4 : vector<8x8xf32>
    %6 = arith.extui %5 : vector<8x8xi1> to vector<8x8xi32>
    %7 = arith.sitofp %6 : vector<8x8xi32> to vector<8x8xf32>
    %cst_7 = arith.constant dense<0.000000e+00> : vector<8xf32>
    %8 = vector.multi_reduction <add>, %7, %cst_7 [1] : vector<8x8xf32> to vector<8xf32>
    %9 = vector.shape_cast %8 : vector<8xf32> to vector<8x1xf32>
    %cst_8 = arith.constant 9.99999996E-13 : f32
    %10 = vector.broadcast %cst_8 : f32 to vector<8x1xf32>
    %11 = arith.addf %9, %10 : vector<8x1xf32>
    %cst_9 = arith.constant dense<0.000000e+00> : vector<8x32xf32>
    %12 = vector.multi_reduction <add>, %0, %cst_9 [1] : vector<8x8x32xf32> to vector<8x32xf32>
    %13 = vector.broadcast %11 : vector<8x1xf32> to vector<8x32xf32>
    %14 = arith.divf %12, %13 : vector<8x32xf32>
    %cst_10 = arith.constant dense<0.000000e+00> : vector<8x32xf32>
    %15 = tpu.matmul %14, %2, %cst_10 {dimension_numbers = #tpu.dot_dimension_numbers<[1], [0], [0], [1], [0, 0, 1, 1], [], []>} : vector<8x32xf32>, vector<32x32xf32>, vector<8x32xf32> -> vector<8x32xf32>
    %cst_11 = arith.constant 5.000000e-01 : f32
    %16 = vector.broadcast %cst_11 : f32 to vector<8x32xf32>
    %17 = arith.mulf %16, %1 : vector<8x32xf32>
    %cst_12 = arith.constant 5.000000e-01 : f32
    %18 = vector.broadcast %cst_12 : f32 to vector<8x32xf32>
    %19 = arith.mulf %18, %15 : vector<8x32xf32>
    %20 = arith.addf %17, %19 : vector<8x32xf32>
    %c0_13 = arith.constant 0 : index
    %c0_14 = arith.constant 0 : index
    %21 = vector.load %arg4[%c0_13, %c0_14] : memref<8x32xf32, #tpu.memory_space<vmem>>, vector<8x32xf32>
    tpu.vector_store %arg4[%c0_13, %c0_14], %20 {strides = array<i32>} : memref<8x32xf32, #tpu.memory_space<vmem>>, vector<8x32xf32>,
    return
  }
  func.func @transform_0(%arg0: i32) -> (i32, i32) {
    %c0_i32 = arith.constant 0 : i32
    %c0_i32_0 = arith.constant 0 : i32
    return %arg0, %c0_i32 : i32, i32
  }
  func.func @transform_1(%arg0: i32) -> (i32, i32, i32) {
    %c0_i32 = arith.constant 0 : i32
    %c0_i32_0 = arith.constant 0 : i32
    %c0_i32_1 = arith.constant 0 : i32
    return %arg0, %c0_i32, %c0_i32_0 : i32, i32, i32
  }
  func.func @transform_2(%arg0: i32) -> (i32, i32) {
    %c0_i32 = arith.constant 0 : i32
    %c0_i32_0 = arith.constant 0 : i32
    %c0_i32_1 = arith.constant 0 : i32
    return %c0_i32, %c0_i32_0 : i32, i32
  }
  func.func @transform_3(%arg0: i32) -> (i32, i32) {
    %c0_i32 = arith.constant 0 : i32
    %c0_i32_0 = arith.constant 0 : i32
    return %arg0, %c0_i32 : i32, i32
  }
}

</mosaic_0001>

<llo_original>
// kernel: tpu_custom_call.1
$region0: #{tpu_custom_call.1}
  #allocation0 [shape = 'u32[]', space=smem, size = 0x4, offset = 0x4, fixed_abs, tag = 'smem constant byte address 0x4 - core index']
  #allocation1 [shape = 'u32[144,128]{1,0:T(1,128)}', space=vmem, size = 0x12000, scoped, tag = 'internal scratch']
  %s0 = inlined_call_operand.hbm [shape: f32[16,32], index: 0, kind: input, shape index: {}]
  %s1 = inlined_call_operand.hbm [shape: f32[16,8,32], index: 1, kind: input, shape index: {}]
  %s2 = inlined_call_operand.hbm [shape: f32[32,32], index: 2, kind: input, shape index: {}]
  %s3 = inlined_call_operand.hbm [shape: f32[16,32], index: 3, kind: output, shape index: {}]
  %s4 = sld [smem:[#allocation0]]
  $region57: #{tpu_custom_call.1} parent=0
    _
  %s6 = ssub.s32 1, %s4
  %s7 = scalar_select 0, %s6, %s4
  $region1: #{tpu_custom_call.1} parent=0
    #allocation2 [shape = 'u8[8192]{0}', space=vmem, size = 0x2000, scoped, tag = 'input window, operand 0']
    #allocation3 [shape = 's32[2]{0}', space=sflag, size = 0x8, scoped, tag = 'scoped memory for tpu_custom_call.1']
    #allocation4 [shape = 's32[2]{0}', space=sflag, size = 0x8, scoped, tag = 'scoped memory for tpu_custom_call.1']
    #allocation5 [shape = 'u8[65536]{0}', space=vmem, size = 0x10000, scoped, tag = 'input window, operand 1']
    #allocation6 [shape = 's32[2]{0}', space=sflag, size = 0x8, scoped, tag = 'scoped memory for tpu_custom_call.1']
    #allocation7 [shape = 'u8[16384]{0}', space=vmem, size = 0x4000, scoped, tag = 'input window, operand 2, single buffered']
    #allocation8 [shape = 'u8[8192]{0}', space=vmem, size = 0x2000, scoped, tag = 'output window, operand 0']
    %8 = vsyncpa [#allocation3], 0
    %s9 = scalar_lea.sflag [#allocation3], 1
    %10 = vsyncpa %s9, 0
    %11 = vsyncpa [#allocation6], 0
    %s12 = scalar_lea.sflag [#allocation6], 1
    %13 = vsyncpa %s12, 0
    %14 = vsyncpa [#allocation4], 0
    %s15 = scalar_lea.sflag [#allocation4], 1
    %16 = vsyncpa %s15, 0
    loop: start=0, step=1, limit=4
    $region2: #{tpu_custom_call.1} parent=1 // loop_pre_header
      _
    $region3: #{tpu_custom_call.1} parent=1 // loop_header
      %s18 = sphi 0, %s22
      %p19 = scmp.ge.s32.totalorder %s18, 4
      %s28 = sphi 0, %s30
      %s31 = sphi 0, %s28
      %s32 = sphi 0, %s31
      %s48 = sphi 0, %s32
      %s54 = sphi 0, %s56
      %s57 = sphi 0, %s54
      %s58 = sphi 0, %s57
      %s74 = sphi 0, %s58
      %s78 = sphi 0, %s78
      %s80 = sphi 0, %s78
      %s81 = sphi 0, %s80
      %s95 = sphi 0, %s81
      %s101 = sphi 0, %s103
      %s104 = sphi 0, %s101
      %s105 = sphi 0, %s104
      %s121 = sphi 0, %s105
    $region4: #{tpu_custom_call.1} parent=1 // loop_header_branch
      %21 = sbr.rel (%p19) target = $region8
    $region5: #{tpu_custom_call.1} parent=1 // loop_body
      %s23 = ssub.s32 %s18, 1
      %s24 = ssub.s32 %s18, 2
      %s25 = sadd.s32 %s18, 1
      %s26 = ssub.s32 %s18, %s25
      %p27 = scmp.eq.s32.totalorder %s26, 0
      %s29 = sadd.s32 %s28, 1
      %s30 = scalar_select %p27, %s28, %s29
      %p33 = pneg %p27
      %p34 = scmp.eq.s32.totalorder %s18, 1
      %p35 = por %p33, %p34
      %p36 = scmp.ne.s32.totalorder %s28, %s31
      %p37 = scmp.eq.s32.totalorder %s18, 0
      %p38 = por %p36, %p37
      %p39 = scmp.ne.s32.totalorder %s28, %s31
      %p40 = scmp.eq.s32.totalorder %s23, 1
      %p41 = por %p39, %p40
      %p42 = scmp.ne.s32.totalorder %s31, %s32
      %p43 = scmp.eq.s32.totalorder %s23, 0
      %p44 = por %p42, %p43
      %p45 = scmp.ne.s32.totalorder %s31, %s32
      %p46 = scmp.eq.s32.totalorder %s24, 1
      %p47 = por %p45, %p46
      %p49 = scmp.ne.s32.totalorder %s32, %s48
      %p50 = scmp.eq.s32.totalorder %s24, 0
      %p51 = por %p49, %p50
      %s52 = ssub.s32 %s18, %s25
      %p53 = scmp.eq.s32.totalorder %s52, 0
      %s55 = sadd.s32 %s54, 1
      %s56 = scalar_select %p53, %s54, %s55
      %p59 = pneg %p53
      %p60 = scmp.eq.s32.totalorder %s18, 1
      %p61 = por %p59, %p60
      %p62 = scmp.ne.s32.totalorder %s54, %s57
      %p63 = scmp.eq.s32.totalorder %s18, 0
      %p64 = por %p62, %p63
      %p65 = scmp.ne.s32.totalorder %s54, %s57
      %p66 = scmp.eq.s32.totalorder %s23, 1
      %p67 = por %p65, %p66
      %p68 = scmp.ne.s32.totalorder %s57, %s58
      %p69 = scmp.eq.s32.totalorder %s23, 0
      %p70 = por %p68, %p69
      %p71 = scmp.ne.s32.totalorder %s57, %s58
      %p72 = scmp.eq.s32.totalorder %s24, 1
      %p73 = por %p71, %p72
      %p75 = scmp.ne.s32.totalorder %s58, %s74
      %p76 = scmp.eq.s32.totalorder %s24, 0
      %p77 = por %p75, %p76
      %s79 = sadd.s32 %s78, 1
      %p82 = scmp.eq.s32.totalorder %s18, 1
      %p83 = scmp.ne.s32.totalorder %s78, %s80
      %p84 = scmp.eq.s32.totalorder %s18, 0
      %p85 = por %p83, %p84
      %p86 = scmp.ne.s32.totalorder %s78, %s80
      %p87 = scmp.eq.s32.totalorder %s23, 1
      %p88 = por %p86, %p87
      %p89 = scmp.ne.s32.totalorder %s80, %s81
      %p90 = scmp.eq.s32.totalorder %s23, 0
      %p91 = por %p89, %p90
      %p92 = scmp.ne.s32.totalorder %s80, %s81
      %p93 = scmp.eq.s32.totalorder %s24, 1
      %p94 = por %p92, %p93
      %p96 = scmp.ne.s32.totalorder %s81, %s95
      %p97 = scmp.eq.s32.totalorder %s24, 0
      %p98 = por %p96, %p97
      %s99 = ssub.s32 %s18, %s25
      %p100 = scmp.eq.s32.totalorder %s99, 0
      %s102 = sadd.s32 %s101, 1
      %s103 = scalar_select %p100, %s101, %s102
      %p106 = pneg %p100
      %p107 = scmp.eq.s32.totalorder %s18, 1
      %p108 = por %p106, %p107
      %p109 = scmp.ne.s32.totalorder %s101, %s104
      %p110 = scmp.eq.s32.totalorder %s18, 0
      %p111 = por %p109, %p110
      %p112 = scmp.ne.s32.totalorder %s101, %s104
      %p113 = scmp.eq.s32.totalorder %s23, 1
      %p114 = por %p112, %p113
      %p115 = scmp.ne.s32.totalorder %s104, %s105
      %p116 = scmp.eq.s32.totalorder %s23, 0
      %p117 = por %p115, %p116
      %p118 = scmp.ne.s32.totalorder %s104, %s105
      %p119 = scmp.eq.s32.totalorder %s24, 1
      %p120 = por %p118, %p119
      %p122 = scmp.ne.s32.totalorder %s105, %s121
      %p123 = scmp.eq.s32.totalorder %s24, 0
      %p124 = por %p122, %p123
      %p125 = scmp.le.s32.totalorder 1, %s18
      %p126 = scmp.lt.s32.totalorder %s18, 3
      %p127 = pnand %p125, %p126
      %p128 = pneg %p127
      // Predicated region
      $region9: #{tpu_custom_call.1} parent=5 // pred_check
        _
      $region10: #{tpu_custom_call.1} parent=5 // pred_check_branch
        %130 = sbr.rel (%p127) target = $region12
      $region11: #{tpu_custom_call.1} parent=5 // pred_region
        %s131 = ssub.s32 %s18, 1
        // Predicated region
        $region13: #{tpu_custom_call.1} parent=11 // pred_check
          %p132 = pneg %p91
        $region14: #{tpu_custom_call.1} parent=11 // pred_check_branch
          %134 = sbr.rel (%p132) target = $region16
        $region15: #{tpu_custom_call.1} parent=11 // pred_region
          %s136 = ssub.s32 512, 512
          %137 = vsyncadd [#allocation6], %s136
          %s138 = sshll.u32 [#allocation7], 4
          %s139 = int_to_ptr.vmem [resolvable:$true] %s138
          %144 = dma.hbm_to_vmem [thread:$0]  %s2, 512, %s139, [#allocation6], 128, 128, 8
        $region16: #{tpu_custom_call.1} parent=11 // pred_fallthru
          _
      $region12: #{tpu_custom_call.1} parent=5 // pred_fallthru
        _
      %p145 = scmp.lt.s32.totalorder %s18, 2
      // Predicated region
      $region17: #{tpu_custom_call.1} parent=5 // pred_check
        %p146 = pneg %p145
      $region18: #{tpu_custom_call.1} parent=5 // pred_check_branch
        %148 = sbr.rel (%p146) target = $region20
      $region19: #{tpu_custom_call.1} parent=5 // pred_region
        // Predicated region
        $region21: #{tpu_custom_call.1} parent=19 // pred_check
          %p149 = pneg %p38
        $region22: #{tpu_custom_call.1} parent=19 // pred_check_branch
          %151 = sbr.rel (%p149) target = $region24
        $region23: #{tpu_custom_call.1} parent=19 // pred_region
          %s152 = sand.u32 %s28, 1
          %s153 = scalar_lea.sflag [#allocation3], %s152
          %s154 = sand.u32 %s28, 1
          %s155 = smul.addr %s154, 8
          %s156 = scalar_lea.vmem [#allocation2], %s155
          %s158 = ssub.s32 128, 128
          %159 = vsyncadd %s153, %s158
          %s160 = smul.addr %s18, 128
          %s161 = scalar_lea.hbm %s0, %s160
          %s163 = sshll.u32 %s156, 4
          %s164 = int_to_ptr.vmem [resolvable:$true] %s163
          %166 = dma.hbm_to_vmem [thread:$0]  %s161, 128, %s164, %s153
        $region24: #{tpu_custom_call.1} parent=19 // pred_fallthru
          _
        // Predicated region
        $region25: #{tpu_custom_call.1} parent=19 // pred_check
          %p167 = pneg %p64
        $region26: #{tpu_custom_call.1} parent=19 // pred_check_branch
          %169 = sbr.rel (%p167) target = $region28
        $region27: #{tpu_custom_call.1} parent=19 // pred_region
          %s170 = sand.u32 %s18, 1
          %s171 = scalar_lea.sflag [#allocation6], %s170
          %s172 = sand.u32 %s54, 1
          %s173 = smul.addr %s172, 64
          %s174 = scalar_lea.vmem [#allocation5], %s173
          %s175 = smul.u32 8, %s18
          %s177 = ssub.s32 1024, 1024
          %178 = vsyncadd %s171, %s177
          %s179 = smul.addr %s175, 128
          %s180 = scalar_lea.hbm %s1, %s179
          %s181 = sshll.u32 %s174, 4
          %s182 = int_to_ptr.vmem [resolvable:$true] %s181
          %187 = dma.hbm_to_vmem [thread:$0]  %s180, 1024, %s182, %s171, 128, 128, 8
        $region28: #{tpu_custom_call.1} parent=19 // pred_fallthru
          _
      $region20: #{tpu_custom_call.1} parent=5 // pred_fallthru
        _
      %p188 = scmp.le.s32.totalorder 1, %s18
      %p189 = scmp.lt.s32.totalorder %s18, 3
      %p190 = pnand %p188, %p189
      %p191 = pneg %p190
      // Predicated region
      $region29: #{tpu_custom_call.1} parent=5 // pred_check
        _
      $region30: #{tpu_custom_call.1} parent=5 // pred_check_branch
        %193 = sbr.rel (%p190) target = $region32
      $region31: #{tpu_custom_call.1} parent=5 // pred_region
        %s194 = ssub.s32 %s18, 1
        %s195 = sand.u32 %s31, 1
        %s196 = scalar_lea.sflag [#allocation3], %s195
        %s197 = sand.u32 %s31, 1
        %s198 = smul.addr %s197, 8
        %s199 = scalar_lea.vmem [#allocation2], %s198
        // Predicated region
        $region33: #{tpu_custom_call.1} parent=31 // pred_check
          %p200 = pneg %p44
        $region34: #{tpu_custom_call.1} parent=31 // pred_check_branch
          %202 = sbr.rel (%p200) target = $region36
        $region35: #{tpu_custom_call.1} parent=31 // pred_region
          %203 = dma.done %s196, 128
        $region36: #{tpu_custom_call.1} parent=31 // pred_fallthru
          _
        %s204 = sand.u32 %s23, 1
        %s205 = scalar_lea.sflag [#allocation6], %s204
        %s206 = sand.u32 %s57, 1
        %s207 = smul.addr %s206, 64
        %s208 = scalar_lea.vmem [#allocation5], %s207
        // Predicated region
        $region37: #{tpu_custom_call.1} parent=31 // pred_check
          %p209 = pneg %p70
        $region38: #{tpu_custom_call.1} parent=31 // pred_check_branch
          %211 = sbr.rel (%p209) target = $region40
        $region39: #{tpu_custom_call.1} parent=31 // pred_region
          %212 = dma.done %s205, 1024
        $region40: #{tpu_custom_call.1} parent=31 // pred_fallthru
          _
        // Predicated region
        $region41: #{tpu_custom_call.1} parent=31 // pred_check
          %p213 = pneg %p91
        $region42: #{tpu_custom_call.1} parent=31 // pred_check_branch
          %215 = sbr.rel (%p213) target = $region44
        $region43: #{tpu_custom_call.1} parent=31 // pred_region
          %216 = dma.done [#allocation6], 512
        $region44: #{tpu_custom_call.1} parent=31 // pred_fallthru
          _
        %s217 = sand.u32 %s31, 1
        %s218 = scalar_lea.sflag [#allocation3], %s217
        %s219 = sand.u32 %s31, 1
        %s220 = smul.addr %s219, 8
        %s221 = scalar_lea.vmem [#allocation2], %s220
        %p222 = pneg %p44
        %p223 = pneg %p41
        %s224 = sand.u32 %s23, 1
        %s225 = scalar_lea.sflag [#allocation6], %s224
        %s226 = sand.u32 %s57, 1
        %s227 = smul.addr %s226, 64
        %s228 = scalar_lea.vmem [#allocation5], %s227
        %p229 = pneg %p70
        %p230 = pneg %p67
        %p231 = pneg %p91
        %p232 = pneg %p88
        %p233 = pneg %p117
        %p234 = pneg %p114
        %s235 = sand.u32 %s104, 1
        %s236 = scalar_lea.sflag [#allocation4], %s235
        %s237 = sand.u32 %s104, 1
        %s238 = smul.addr %s237, 8
        %s239 = scalar_lea.vmem [#allocation8], %s238
        %s240 = smul.u32 8, %s23
        %v241 = vld [vmem:[%s208] sm:$0xff]
        %v242 = vld [vmem:[%s208 + $0x8] sm:$0xff]
        %v243 = vld [vmem:[%s208 + $0x10] sm:$0xff]
        %v244 = vld [vmem:[%s208 + $0x18] sm:$0xff]
        %v245 = vld [vmem:[%s208 + $0x20] sm:$0xff]
        %v246 = vld [vmem:[%s208 + $0x28] sm:$0xff]
        %v247 = vld [vmem:[%s208 + $0x30] sm:$0xff]
        %v248 = vld [vmem:[%s208 + $0x38] sm:$0xff]
        %v249 = vld [vmem:[%s199] sm:$0xff]
        %v250 = vld [vmem:[#allocation7] sm:$0xff]
        %v251 = vld [vmem:[#allocation7 + $0x8] sm:$0xff]
        %v252 = vld [vmem:[#allocation7 + $0x10] sm:$0xff]
        %v253 = vld [vmem:[#allocation7 + $0x18] sm:$0xff]
        %vm254 = vcmask 261120
        %v255 = vsel %vm254, %v241, 0.0
        %256 = vadd.xlane.f32.xlu0 %v255
        %v257 = vpop.xlane.xlu0 %256
        %v258 = vsel %vm254, %v242, 0.0
        %259 = vadd.xlane.f32.xlu0 %v258
        %v260 = vpop.xlane.xlu0 %259
        %v261 = vsel %vm254, %v243, 0.0
        %262 = vadd.xlane.f32.xlu0 %v261
        %v263 = vpop.xlane.xlu0 %262
        %v264 = vsel %vm254, %v244, 0.0
        %265 = vadd.xlane.f32.xlu0 %v264
        %v266 = vpop.xlane.xlu0 %265
        %v267 = vsel %vm254, %v245, 0.0
        %268 = vadd.xlane.f32.xlu0 %v267
        %v269 = vpop.xlane.xlu0 %268
        %v270 = vsel %vm254, %v246, 0.0
        %271 = vadd.xlane.f32.xlu0 %v270
        %v272 = vpop.xlane.xlu0 %271
        %v273 = vsel %vm254, %v247, 0.0
        %274 = vadd.xlane.f32.xlu0 %v273
        %v275 = vpop.xlane.xlu0 %274
        %v276 = vsel %vm254, %v248, 0.0
        %277 = vadd.xlane.f32.xlu0 %v276
        %v278 = vpop.xlane.xlu0 %277
        %vm279 = vcmp.ne.f32.partialorder %v257, 0.0
        %vm280 = vcmp.ne.f32.partialorder %v260, 0.0
        %vm281 = vcmp.ne.f32.partialorder %v263, 0.0
        %vm282 = vcmp.ne.f32.partialorder %v266, 0.0
        %vm283 = vcmp.ne.f32.partialorder %v269, 0.0
        %vm284 = vcmp.ne.f32.partialorder %v272, 0.0
        %vm285 = vcmp.ne.f32.partialorder %v275, 0.0
        %vm286 = vcmp.ne.f32.partialorder %v278, 0.0
        %v287 = vsel %vm279, 1, 0
        %v288 = vsel %vm280, 1, 0
        %v289 = vsel %vm281, 1, 0
        %v290 = vsel %vm282, 1, 0
        %v291 = vsel %vm283, 1, 0
        %v292 = vsel %vm284, 1, 0
        %v293 = vsel %vm285, 1, 0
        %v294 = vsel %vm286, 1, 0
        %v295 = vcvt.s32.f32 %v287
        %v296 = vcvt.s32.f32 %v288
        %v297 = vcvt.s32.f32 %v289
        %v298 = vcvt.s32.f32 %v290
        %v299 = vcvt.s32.f32 %v291
        %v300 = vcvt.s32.f32 %v292
        %v301 = vcvt.s32.f32 %v293
        %v302 = vcvt.s32.f32 %v294
        %v311 = vlaneseq
        %v312 = vand.u32 %v311, 127
        %v313 = vlaneseq
        %v314 = vshrl.u32 %v313, 7
        %v315 = vsub.s32 %v312, %v314
        %v316 = vrot.slane %v295, %v315
        %v317 = vlaneseq
        %v318 = vshrl.u32 %v317, 7
        %v319 = vsub.s32 %v312, %v318
        %v320 = vrot.slane %v296, %v319
        %v321 = vlaneseq
        %v322 = vshrl.u32 %v321, 7
        %v323 = vsub.s32 %v312, %v322
        %v324 = vrot.slane %v297, %v323
        %v325 = vlaneseq
        %v326 = vshrl.u32 %v325, 7
        %v327 = vsub.s32 %v312, %v326
        %v328 = vrot.slane %v298, %v327
        %v329 = vlaneseq
        %v330 = vshrl.u32 %v329, 7
        %v331 = vsub.s32 %v312, %v330
        %v332 = vrot.slane %v299, %v331
        %v333 = vlaneseq
        %v334 = vshrl.u32 %v333, 7
        %v335 = vsub.s32 %v312, %v334
        %v336 = vrot.slane %v300, %v335
        %v337 = vlaneseq
        %v338 = vshrl.u32 %v337, 7
        %v339 = vsub.s32 %v312, %v338
        %v340 = vrot.slane %v301, %v339
        %v341 = vlaneseq
        %v342 = vshrl.u32 %v341, 7
        %v343 = vsub.s32 %v312, %v342
        %v344 = vrot.slane %v302, %v343
        %vm345 = vcmask 1041409
        %v346 = vsel %vm345, %v320, %v316
        %vm347 = vcmask 1042434
        %v348 = vsel %vm347, %v324, %v346
        %vm349 = vcmask 1043459
        %v350 = vsel %vm349, %v328, %v348
        %vm351 = vcmask 1044484
        %v352 = vsel %vm351, %v332, %v350
        %vm353 = vcmask 1045509
        %v354 = vsel %vm353, %v336, %v352
        %vm355 = vcmask 1046534
        %v356 = vsel %vm355, %v340, %v354
        %vm357 = vcmask 1047559
        %v358 = vsel %vm357, %v344, %v356
        %vm360 = vcmask 64512
        %v361 = vsel %vm360, %v358, 0.0
        %362 = vadd.xlane.f32.xlu0 %v361
        %v363 = vpop.xlane.xlu0 %362
        %v364 = vadd.f32 %v363, 1e-12
        %v365 = vrot.slane %v255, 4
        %v366 = vadd.f32 %v255, %v365
        %v367 = vrot.slane %v366, 2
        %v368 = vadd.f32 %v366, %v367
        %v369 = vrot.slane %v368, 1
        %v370 = vadd.f32 %v368, %v369
        %v371 = vrot.slane %v258, 4
        %v372 = vadd.f32 %v258, %v371
        %v373 = vrot.slane %v372, 2
        %v374 = vadd.f32 %v372, %v373
        %v375 = vrot.slane %v374, 1
        %v376 = vadd.f32 %v374, %v375
        %v377 = vrot.slane %v261, 4
        %v378 = vadd.f32 %v261, %v377
        %v379 = vrot.slane %v378, 2
        %v380 = vadd.f32 %v378, %v379
        %v381 = vrot.slane %v380, 1
        %v382 = vadd.f32 %v380, %v381
        %v383 = vrot.slane %v264, 4
        %v384 = vadd.f32 %v264, %v383
        %v385 = vrot.slane %v384, 2
        %v386 = vadd.f32 %v384, %v385
        %v387 = vrot.slane %v386, 1
        %v388 = vadd.f32 %v386, %v387
        %v389 = vrot.slane %v267, 4
        %v390 = vadd.f32 %v267, %v389
        %v391 = vrot.slane %v390, 2
        %v392 = vadd.f32 %v390, %v391
        %v393 = vrot.slane %v392, 1
        %v394 = vadd.f32 %v392, %v393
        %v395 = vrot.slane %v270, 4
        %v396 = vadd.f32 %v270, %v395
        %v397 = vrot.slane %v396, 2
        %v398 = vadd.f32 %v396, %v397
        %v399 = vrot.slane %v398, 1
        %v400 = vadd.f32 %v398, %v399
        %v401 = vrot.slane %v273, 4
        %v402 = vadd.f32 %v273, %v401
        %v403 = vrot.slane %v402, 2
        %v404 = vadd.f32 %v402, %v403
        %v405 = vrot.slane %v404, 1
        %v406 = vadd.f32 %v404, %v405
        %v407 = vrot.slane %v276, 4
        %v408 = vadd.f32 %v276, %v407
        %v409 = vrot.slane %v408, 2
        %v410 = vadd.f32 %v408, %v409
        %v411 = vrot.slane %v410, 1
        %v412 = vadd.f32 %v410, %v411
        %v414 = vrot.slane %v364, 1
        %v415 = vrot.slane %v364, 2
        %v416 = vrot.slane %v364, 3
        %v417 = vrot.slane %v364, 4
        %v418 = vrot.slane %v364, 5
        %v419 = vrot.slane %v364, 6
        %v420 = vrot.slane %v364, 7
        %v429 = vrcp.pop %v364
        %v430 = vmul.f32 %v370, %v429
        %v431 = vrcp.pop %v414
        %v432 = vmul.f32 %v376, %v431
        %v433 = vrcp.pop %v415
        %v434 = vmul.f32 %v382, %v433
        %v435 = vrcp.pop %v416
        %v436 = vmul.f32 %v388, %v435
        %v437 = vrcp.pop %v417
        %v438 = vmul.f32 %v394, %v437
        %v439 = vrcp.pop %v418
        %v440 = vmul.f32 %v400, %v439
        %v441 = vrcp.pop %v419
        %v442 = vmul.f32 %v406, %v441
        %v443 = vrcp.pop %v420
        %v444 = vmul.f32 %v412, %v443
        %v453 = vrot.slane %v432, 7
        %v454 = vsel %vm345, %v453, %v430
        %v455 = vrot.slane %v434, 6
        %v456 = vsel %vm347, %v455, %v454
        %v457 = vrot.slane %v436, 5
        %v458 = vsel %vm349, %v457, %v456
        %v459 = vrot.slane %v438, 4
        %v460 = vsel %vm351, %v459, %v458
        %v461 = vrot.slane %v440, 3
        %v462 = vsel %vm353, %v461, %v460
        %v463 = vrot.slane %v442, 2
        %v464 = vsel %vm355, %v463, %v462
        %v465 = vrot.slane %v444, 1
        %v466 = vsel %vm357, %v465, %v464
        %v467 = vsel %vm254, %v466, 0
        %469 = vmatprep.subr.mxu0 0.0
        %470 = vmatpush1.msra.mxu0 0.0
        %471 = vmatprep.subr.mxu0 0.0
        %472 = vmatpush1.msra.mxu0 0.0
        %473 = vmatprep.subr.mxu0 0.0
        %474 = vmatpush1.msra.mxu0 0.0
        %475 = vmatprep.subr.mxu0 0.0
        %476 = vmatpush1.msra.mxu0 0.0
        %477 = vmatprep.subr.mxu0 0.0
        %478 = vmatpush1.msra.mxu0 0.0
        %479 = vmatprep.subr.mxu0 0.0
        %480 = vmatpush1.msra.mxu0 0.0
        %481 = vmatprep.subr.mxu0 0.0
        %482 = vmatpush1.msra.mxu0 0.0
        %483 = vmatprep.subr.mxu0 0.0
        %484 = vmatpush1.msra.mxu0 0.0
        %485 = vmatprep.subr.mxu0 0.0
        %486 = vmatpush1.msra.mxu0 0.0
        %487 = vmatprep.subr.mxu0 0.0
        %488 = vmatpush1.msra.mxu0 0.0
        %489 = vmatprep.subr.mxu0 0.0
        %490 = vmatpush1.msra.mxu0 0.0
        %491 = vmatprep.subr.mxu0 0.0
        %492 = vmatpush1.msra.mxu0 0.0
        %493 = vmatprep.subr.mxu0 0.0
        %494 = vmatpush1.msra.mxu0 %v253
        %495 = vmatprep.subr.mxu0 0.0
        %496 = vmatpush1.msra.mxu0 %v252
        %497 = vmatprep.subr.mxu0 0.0
        %498 = vmatpush1.msra.mxu0 %v251
        %499 = vmatprep.subr.mxu0 0.0
        %500 = vmatpush1.msra.mxu0 %v250
        %501 = vmatprep.subr.mxu0 0.0
        %502 = vmatpush2.msra.mxu0 0.0
        %503 = vmatprep.subr.mxu0 0.0
        %504 = vmatpush2.msra.mxu0 0.0
        %505 = vmatprep.subr.mxu0 0.0
        %506 = vmatpush2.msra.mxu0 0.0
        %507 = vmatprep.subr.mxu0 0.0
        %508 = vmatpush2.msra.mxu0 0.0
        %509 = vmatprep.subr.mxu0 0.0
        %510 = vmatpush2.msra.mxu0 0.0
        %511 = vmatprep.subr.mxu0 0.0
        %512 = vmatpush2.msra.mxu0 0.0
        %513 = vmatprep.subr.mxu0 0.0
        %514 = vmatpush2.msra.mxu0 0.0
        %515 = vmatprep.subr.mxu0 0.0
        %516 = vmatpush2.msra.mxu0 0.0
        %517 = vmatprep.subr.mxu0 0.0
        %518 = vmatpush2.msra.mxu0 0.0
        %519 = vmatprep.subr.mxu0 0.0
        %520 = vmatpush2.msra.mxu0 0.0
        %521 = vmatprep.subr.mxu0 0.0
        %522 = vmatpush2.msra.mxu0 0.0
        %523 = vmatprep.subr.mxu0 0.0
        %524 = vmatpush2.msra.mxu0 0.0
        %525 = vmatprep.subr.mxu0 0.0
        %526 = vmatpush2.msra.mxu0 0.0
        %527 = vmatprep.subr.mxu0 0.0
        %528 = vmatpush2.msra.mxu0 0.0
        %529 = vmatprep.subr.mxu0 0.0
        %530 = vmatpush2.msra.mxu0 0.0
        %531 = vmatprep.subr.mxu0 0.0
        %532 = vmatpush2.msra.mxu0 0.0
        %533 = vmatprep.mubr.f32.mxu0 0.0
        %534 = vmatmul.mubr.f32.gmra.mxu0 %v467
        %v535 = vpop.f32.mrf.mxu0
        %v536 = vadd.f32 0.0, %v535
        %v537 = vpop.f32.mrf.mxu0
        %538 = vdwg.mxu0
        %v539 = vmul.f32 %v249, 0.5
        %v540 = vmul.f32 %v536, 0.5
        %v541 = vadd.f32 %v539, %v540
        %542 = vst.msk [vmem:[%s239] sm:$0xff] %vm254, %v541
        %s543 = sand.u32 %s104, 1
        %s544 = scalar_lea.sflag [#allocation4], %s543
        %s545 = sand.u32 %s104, 1
        %s546 = smul.addr %s545, 8
        %s547 = scalar_lea.vmem [#allocation8], %s546
        // Predicated region
        $region45: #{tpu_custom_call.1} parent=31 // pred_check
          %p548 = pneg %p114
        $region46: #{tpu_custom_call.1} parent=31 // pred_check_branch
          %550 = sbr.rel (%p548) target = $region48
        $region47: #{tpu_custom_call.1} parent=31 // pred_region
          %s552 = ssub.s32 128, 128
          %553 = vsyncadd %s544, %s552
          %s554 = smul.addr %s23, 128
          %s555 = scalar_lea.hbm %s3, %s554
          %s557 = sshll.u32 %s547, 4
          %s558 = int_to_ptr.vmem [resolvable:$true] %s557
          %560 = dma.vmem_to_hbm [thread:$0]  %s558, 128, %s555, %s544
        $region48: #{tpu_custom_call.1} parent=31 // pred_fallthru
          _
      $region32: #{tpu_custom_call.1} parent=5 // pred_fallthru
        _
      %p561 = scmp.le.s32.totalorder 2, %s18
      // Predicated region
      $region49: #{tpu_custom_call.1} parent=5 // pred_check
        %p562 = pneg %p561
      $region50: #{tpu_custom_call.1} parent=5 // pred_check_branch
        %564 = sbr.rel (%p562) target = $region52
      $region51: #{tpu_custom_call.1} parent=5 // pred_region
        %s565 = ssub.s32 %s18, 2
        // Predicated region
        $region53: #{tpu_custom_call.1} parent=51 // pred_check
          %p566 = pneg %p120
        $region54: #{tpu_custom_call.1} parent=51 // pred_check_branch
          %568 = sbr.rel (%p566) target = $region56
        $region55: #{tpu_custom_call.1} parent=51 // pred_region
          %s569 = sand.u32 %s105, 1
          %s570 = scalar_lea.sflag [#allocation4], %s569
          %s571 = sand.u32 %s105, 1
          %s572 = smul.addr %s571, 8
          %s573 = scalar_lea.vmem [#allocation8], %s572
          %574 = dma.done %s570, 128
        $region56: #{tpu_custom_call.1} parent=51 // pred_fallthru
          _
      $region52: #{tpu_custom_call.1} parent=5 // pred_fallthru
        _
    $region6: #{tpu_custom_call.1} parent=1 // loop_footer
      %s22 = sadd.s32 1, %s18
    $region7: #{tpu_custom_call.1} parent=1 // loop_footer_branch
      %17 = sbr.rel target = $region3
    $region8: #{tpu_custom_call.1} parent=1 // loop_exit
      _
    %575 = vsyncpa [#allocation3], 1
    %s576 = scalar_lea.sflag [#allocation3], 1
    %577 = vsyncpa %s576, 1
    %578 = vsyncpa [#allocation6], 1
    %s579 = scalar_lea.sflag [#allocation6], 1
    %580 = vsyncpa %s579, 1
    %581 = vsyncpa [#allocation4], 1
    %s582 = scalar_lea.sflag [#allocation4], 1
    %583 = vsyncpa %s582, 1

// kernel: tpu_custom_call.1
$region0: #{tpu_custom_call.1}
  #allocation0 [shape = 'u32[]', space=smem, size = 0x4, offset = 0x4, fixed_abs, tag = 'smem constant byte address 0x4 - core index']
  #allocation1 [shape = 'u32[144,128]{1,0:T(1,128)}', space=vmem, size = 0x12000, scoped, tag = 'internal scratch']
  %s0 = inlined_call_operand.hbm [shape: f32[16,32], index: 0, kind: input, shape index: {}]
  %s1 = inlined_call_operand.hbm [shape: f32[16,8,32], index: 1, kind: input, shape index: {}]
  %s2 = inlined_call_operand.hbm [shape: f32[32,32], index: 2, kind: input, shape index: {}]
  %s3 = inlined_call_operand.hbm [shape: f32[16,32], index: 3, kind: output, shape index: {}]
  %s4 = sld [smem:[#allocation0]]
  $region57: #{tpu_custom_call.1} parent=0
    _
  %s6 = ssub.s32 1, %s4
  %s7 = scalar_select 0, %s6, %s4
  $region1: #{tpu_custom_call.1} parent=0
    #allocation2 [shape = 'u8[8192]{0}', space=vmem, size = 0x2000, scoped, tag = 'input window, operand 0']
    #allocation3 [shape = 's32[2]{0}', space=sflag, size = 0x8, scoped, tag = 'scoped memory for tpu_custom_call.1']
    #allocation4 [shape = 's32[2]{0}', space=sflag, size = 0x8, scoped, tag = 'scoped memory for tpu_custom_call.1']
    #allocation5 [shape = 'u8[65536]{0}', space=vmem, size = 0x10000, scoped, tag = 'input window, operand 1']
    #allocation6 [shape = 's32[2]{0}', space=sflag, size = 0x8, scoped, tag = 'scoped memory for tpu_custom_call.1']
    #allocation7 [shape = 'u8[16384]{0}', space=vmem, size = 0x4000, scoped, tag = 'input window, operand 2, single buffered']
    #allocation8 [shape = 'u8[8192]{0}', space=vmem, size = 0x2000, scoped, tag = 'output window, operand 0']
    %8 = vsyncpa [#allocation3], 0
    %s9 = scalar_lea.sflag [#allocation3], 1
    %10 = vsyncpa %s9, 0
    %11 = vsyncpa [#allocation6], 0
    %s12 = scalar_lea.sflag [#allocation6], 1
    %13 = vsyncpa %s12, 0
    %14 = vsyncpa [#allocation4], 0
    %s15 = scalar_lea.sflag [#allocation4], 1
    %16 = vsyncpa %s15, 0
    loop: start=0, step=1, limit=4
    $region2: #{tpu_custom_call.1} parent=1 // loop_pre_header
      _
    $region3: #{tpu_custom_call.1} parent=1 // loop_header
      %s18 = sphi 0, %s22
      %p19 = scmp.ge.s32.totalorder %s18, 4
      %s28 = sphi 0, %s30
      %s31 = sphi 0, %s28
      %s32 = sphi 0, %s31
      %s48 = sphi 0, %s32
      %s54 = sphi 0, %s56
      %s57 = sphi 0, %s54
      %s58 = sphi 0, %s57
      %s74 = sphi 0, %s58
      %s78 = sphi 0, %s78
      %s80 = sphi 0, %s78
      %s81 = sphi 0, %s80
      %s95 = sphi 0, %s81
      %s101 = sphi 0, %s103
      %s104 = sphi 0, %s101
      %s105 = sphi 0, %s104
      %s121 = sphi 0, %s105
    $region4: #{tpu_custom_call.1} parent=1 // loop_header_branch
      %21 = sbr.rel (%p19) target = $region8
    $region5: #{tpu_custom_call.1} parent=1 // loop_body
      %s23 = ssub.s32 %s18, 1
      %s24 = ssub.s32 %s18, 2
      %s25 = sadd.s32 %s18, 1
      %s26 = ssub.s32 %s18, %s25
      %p27 = scmp.eq.s32.totalorder %s26, 0
      %s29 = sadd.s32 %s28, 1
      %s30 = scalar_select %p27, %s28, %s29
      %p33 = pneg %p27
      %p34 = scmp.eq.s32.totalorder %s18, 1
      %p35 = por %p33, %p34
      %p36 = scmp.ne.s32.totalorder %s28, %s31
      %p37 = scmp.eq.s32.totalorder %s18, 0
      %p38 = por %p36, %p37
      %p39 = scmp.ne.s32.totalorder %s28, %s31
      %p40 = scmp.eq.s32.totalorder %s23, 1
      %p41 = por %p39, %p40
      %p42 = scmp.ne.s32.totalorder %s31, %s32
      %p43 = scmp.eq.s32.totalorder %s23, 0
      %p44 = por %p42, %p43
      %p45 = scmp.ne.s32.totalorder %s31, %s32
      %p46 = scmp.eq.s32.totalorder %s24, 1
      %p47 = por %p45, %p46
      %p49 = scmp.ne.s32.totalorder %s32, %s48
      %p50 = scmp.eq.s32.totalorder %s24, 0
      %p51 = por %p49, %p50
      %s52 = ssub.s32 %s18, %s25
      %p53 = scmp.eq.s32.totalorder %s52, 0
      %s55 = sadd.s32 %s54, 1
      %s56 = scalar_select %p53, %s54, %s55
      %p59 = pneg %p53
      %p60 = scmp.eq.s32.totalorder %s18, 1
      %p61 = por %p59, %p60
      %p62 = scmp.ne.s32.totalorder %s54, %s57
      %p63 = scmp.eq.s32.totalorder %s18, 0
      %p64 = por %p62, %p63
      %p65 = scmp.ne.s32.totalorder %s54, %s57
      %p66 = scmp.eq.s32.totalorder %s23, 1
      %p67 = por %p65, %p66
      %p68 = scmp.ne.s32.totalorder %s57, %s58
      %p69 = scmp.eq.s32.totalorder %s23, 0
      %p70 = por %p68, %p69
      %p71 = scmp.ne.s32.totalorder %s57, %s58
      %p72 = scmp.eq.s32.totalorder %s24, 1
      %p73 = por %p71, %p72
      %p75 = scmp.ne.s32.totalorder %s58, %s74
      %p76 = scmp.eq.s32.totalorder %s24, 0
      %p77 = por %p75, %p76
      %s79 = sadd.s32 %s78, 1
      %p82 = scmp.eq.s32.totalorder %s18, 1
      %p83 = scmp.ne.s32.totalorder %s78, %s80
      %p84 = scmp.eq.s32.totalorder %s18, 0
      %p85 = por %p83, %p84
      %p86 = scmp.ne.s32.totalorder %s78, %s80
      %p87 = scmp.eq.s32.totalorder %s23, 1
      %p88 = por %p86, %p87
      %p89 = scmp.ne.s32.totalorder %s80, %s81
      %p90 = scmp.eq.s32.totalorder %s23, 0
      %p91 = por %p89, %p90
      %p92 = scmp.ne.s32.totalorder %s80, %s81
      %p93 = scmp.eq.s32.totalorder %s24, 1
      %p94 = por %p92, %p93
      %p96 = scmp.ne.s32.totalorder %s81, %s95
      %p97 = scmp.eq.s32.totalorder %s24, 0
      %p98 = por %p96, %p97
      %s99 = ssub.s32 %s18, %s25
      %p100 = scmp.eq.s32.totalorder %s99, 0
      %s102 = sadd.s32 %s101, 1
      %s103 = scalar_select %p100, %s101, %s102
      %p106 = pneg %p100
      %p107 = scmp.eq.s32.totalorder %s18, 1
      %p108 = por %p106, %p107
      %p109 = scmp.ne.s32.totalorder %s101, %s104
      %p110 = scmp.eq.s32.totalorder %s18, 0
      %p111 = por %p109, %p110
      %p112 = scmp.ne.s32.totalorder %s101, %s104
      %p113 = scmp.eq.s32.totalorder %s23, 1
      %p114 = por %p112, %p113
      %p115 = scmp.ne.s32.totalorder %s104, %s105
      %p116 = scmp.eq.s32.totalorder %s23, 0
      %p117 = por %p115, %p116
      %p118 = scmp.ne.s32.totalorder %s104, %s105
      %p119 = scmp.eq.s32.totalorder %s24, 1
      %p120 = por %p118, %p119
      %p122 = scmp.ne.s32.totalorder %s105, %s121
      %p123 = scmp.eq.s32.totalorder %s24, 0
      %p124 = por %p122, %p123
      %p125 = scmp.le.s32.totalorder 1, %s18
      %p126 = scmp.lt.s32.totalorder %s18, 3
      %p127 = pnand %p125, %p126
      %p128 = pneg %p127
      // Predicated region
      $region9: #{tpu_custom_call.1} parent=5 // pred_check
        _
      $region10: #{tpu_custom_call.1} parent=5 // pred_check_branch
        %130 = sbr.rel (%p127) target = $region12
      $region11: #{tpu_custom_call.1} parent=5 // pred_region
        %s131 = ssub.s32 %s18, 1
        // Predicated region
        $region13: #{tpu_custom_call.1} parent=11 // pred_check
          %p132 = pneg %p91
        $region14: #{tpu_custom_call.1} parent=11 // pred_check_branch
          %134 = sbr.rel (%p132) target = $region16
        $region15: #{tpu_custom_call.1} parent=11 // pred_region
          %s136 = ssub.s32 512, 512
          %137 = vsyncadd [#allocation6], %s136
          %s138 = sshll.u32 [#allocation7], 4
          %s139 = int_to_ptr.vmem [resolvable:$true] %s138
          %144 = dma.hbm_to_vmem [thread:$0]  %s2, 512, %s139, [#allocation6], 128, 128, 8
        $region16: #{tpu_custom_call.1} parent=11 // pred_fallthru
          _
      $region12: #{tpu_custom_call.1} parent=5 // pred_fallthru
        _
      %p145 = scmp.lt.s32.totalorder %s18, 2
      // Predicated region
      $region17: #{tpu_custom_call.1} parent=5 // pred_check
        %p146 = pneg %p145
      $region18: #{tpu_custom_call.1} parent=5 // pred_check_branch
        %148 = sbr.rel (%p146) target = $region20
      $region19: #{tpu_custom_call.1} parent=5 // pred_region
        // Predicated region
        $region21: #{tpu_custom_call.1} parent=19 // pred_check
          %p149 = pneg %p38
        $region22: #{tpu_custom_call.1} parent=19 // pred_check_branch
          %151 = sbr.rel (%p149) target = $region24
        $region23: #{tpu_custom_call.1} parent=19 // pred_region
          %s152 = sand.u32 %s28, 1
          %s153 = scalar_lea.sflag [#allocation3], %s152
          %s154 = sand.u32 %s28, 1
          %s155 = smul.addr %s154, 8
          %s156 = scalar_lea.vmem [#allocation2], %s155
          %s158 = ssub.s32 128, 128
          %159 = vsyncadd %s153, %s158
          %s160 = smul.addr %s18, 128
          %s161 = scalar_lea.hbm %s0, %s160
          %s163 = sshll.u32 %s156, 4
          %s164 = int_to_ptr.vmem [resolvable:$true] %s163
          %166 = dma.hbm_to_vmem [thread:$0]  %s161, 128, %s164, %s153
        $region24: #{tpu_custom_call.1} parent=19 // pred_fallthru
          _
        // Predicated region
        $region25: #{tpu_custom_call.1} parent=19 // pred_check
          %p167 = pneg %p64
        $region26: #{tpu_custom_call.1} parent=19 // pred_check_branch
          %169 = sbr.rel (%p167) target = $region28
        $region27: #{tpu_custom_call.1} parent=19 // pred_region
          %s170 = sand.u32 %s18, 1
          %s171 = scalar_lea.sflag [#allocation6], %s170
          %s172 = sand.u32 %s54, 1
          %s173 = smul.addr %s172, 64
          %s174 = scalar_lea.vmem [#allocation5], %s173
          %s175 = smul.u32 8, %s18
          %s177 = ssub.s32 1024, 1024
          %178 = vsyncadd %s171, %s177
          %s179 = smul.addr %s175, 128
          %s180 = scalar_lea.hbm %s1, %s179
          %s181 = sshll.u32 %s174, 4
          %s182 = int_to_ptr.vmem [resolvable:$true] %s181
          %187 = dma.hbm_to_vmem [thread:$0]  %s180, 1024, %s182, %s171, 128, 128, 8
        $region28: #{tpu_custom_call.1} parent=19 // pred_fallthru
          _
      $region20: #{tpu_custom_call.1} parent=5 // pred_fallthru
        _
      %p188 = scmp.le.s32.totalorder 1, %s18
      %p189 = scmp.lt.s32.totalorder %s18, 3
      %p190 = pnand %p188, %p189
      %p191 = pneg %p190
      // Predicated region
      $region29: #{tpu_custom_call.1} parent=5 // pred_check
        _
      $region30: #{tpu_custom_call.1} parent=5 // pred_check_branch
        %193 = sbr.rel (%p190) target = $region32
      $region31: #{tpu_custom_call.1} parent=5 // pred_region
        %s194 = ssub.s32 %s18, 1
        %s195 = sand.u32 %s31, 1
        %s196 = scalar_lea.sflag [#allocation3], %s195
        %s197 = sand.u32 %s31, 1
        %s198 = smul.addr %s197, 8
        %s199 = scalar_lea.vmem [#allocation2], %s198
        // Predicated region
        $region33: #{tpu_custom_call.1} parent=31 // pred_check
          %p200 = pneg %p44
        $region34: #{tpu_custom_call.1} parent=31 // pred_check_branch
          %202 = sbr.rel (%p200) target = $region36
        $region35: #{tpu_custom_call.1} parent=31 // pred_region
          %203 = dma.done %s196, 128
        $region36: #{tpu_custom_call.1} parent=31 // pred_fallthru
          _
        %s204 = sand.u32 %s23, 1
        %s205 = scalar_lea.sflag [#allocation6], %s204
        %s206 = sand.u32 %s57, 1
        %s207 = smul.addr %s206, 64
        %s208 = scalar_lea.vmem [#allocation5], %s207
        // Predicated region
        $region37: #{tpu_custom_call.1} parent=31 // pred_check
          %p209 = pneg %p70
        $region38: #{tpu_custom_call.1} parent=31 // pred_check_branch
          %211 = sbr.rel (%p209) target = $region40
        $region39: #{tpu_custom_call.1} parent=31 // pred_region
          %212 = dma.done %s205, 1024
        $region40: #{tpu_custom_call.1} parent=31 // pred_fallthru
          _
        // Predicated region
        $region41: #{tpu_custom_call.1} parent=31 // pred_check
          %p213 = pneg %p91
        $region42: #{tpu_custom_call.1} parent=31 // pred_check_branch
          %215 = sbr.rel (%p213) target = $region44
        $region43: #{tpu_custom_call.1} parent=31 // pred_region
          %216 = dma.done [#allocation6], 512
        $region44: #{tpu_custom_call.1} parent=31 // pred_fallthru
          _
        %s217 = sand.u32 %s31, 1
        %s218 = scalar_lea.sflag [#allocation3], %s217
        %s219 = sand.u32 %s31, 1
        %s220 = smul.addr %s219, 8
        %s221 = scalar_lea.vmem [#allocation2], %s220
        %p222 = pneg %p44
        %p223 = pneg %p41
        %s224 = sand.u32 %s23, 1
        %s225 = scalar_lea.sflag [#allocation6], %s224
        %s226 = sand.u32 %s57, 1
        %s227 = smul.addr %s226, 64
        %s228 = scalar_lea.vmem [#allocation5], %s227
        %p229 = pneg %p70
        %p230 = pneg %p67
        %p231 = pneg %p91
        %p232 = pneg %p88
        %p233 = pneg %p117
        %p234 = pneg %p114
        %s235 = sand.u32 %s104, 1
        %s236 = scalar_lea.sflag [#allocation4], %s235
        %s237 = sand.u32 %s104, 1
        %s238 = smul.addr %s237, 8
        %s239 = scalar_lea.vmem [#allocation8], %s238
        %s240 = smul.u32 8, %s23
        %v241 = vld [vmem:[%s208] sm:$0xff]
        %v242 = vld [vmem:[%s208 + $0x8] sm:$0xff]
        %v243 = vld [vmem:[%s208 + $0x10] sm:$0xff]
        %v244 = vld [vmem:[%s208 + $0x18] sm:$0xff]
        %v245 = vld [vmem:[%s208 + $0x20] sm:$0xff]
        %v246 = vld [vmem:[%s208 + $0x28] sm:$0xff]
        %v247 = vld [vmem:[%s208 + $0x30] sm:$0xff]
        %v248 = vld [vmem:[%s208 + $0x38] sm:$0xff]
        %v249 = vld [vmem:[%s199] sm:$0xff]
        %v250 = vld [vmem:[#allocation7] sm:$0xff]
        %v251 = vld [vmem:[#allocation7 + $0x8] sm:$0xff]
        %v252 = vld [vmem:[#allocation7 + $0x10] sm:$0xff]
        %v253 = vld [vmem:[#allocation7 + $0x18] sm:$0xff]
        %vm254 = vcmask 261120
        %v255 = vsel %vm254, %v241, 0.0
        %256 = vadd.xlane.f32.xlu0 %v255
        %v257 = vpop.xlane.xlu0 %256
        %v258 = vsel %vm254, %v242, 0.0
        %259 = vadd.xlane.f32.xlu0 %v258
        %v260 = vpop.xlane.xlu0 %259
        %v261 = vsel %vm254, %v243, 0.0
        %262 = vadd.xlane.f32.xlu0 %v261
        %v263 = vpop.xlane.xlu0 %262
        %v264 = vsel %vm254, %v244, 0.0
        %265 = vadd.xlane.f32.xlu0 %v264
        %v266 = vpop.xlane.xlu0 %265
        %v267 = vsel %vm254, %v245, 0.0
        %268 = vadd.xlane.f32.xlu0 %v267
        %v269 = vpop.xlane.xlu0 %268
        %v270 = vsel %vm254, %v246, 0.0
        %271 = vadd.xlane.f32.xlu0 %v270
        %v272 = vpop.xlane.xlu0 %271
        %v273 = vsel %vm254, %v247, 0.0
        %274 = vadd.xlane.f32.xlu0 %v273
        %v275 = vpop.xlane.xlu0 %274
        %v276 = vsel %vm254, %v248, 0.0
        %277 = vadd.xlane.f32.xlu0 %v276
        %v278 = vpop.xlane.xlu0 %277
        %vm279 = vcmp.ne.f32.partialorder %v257, 0.0
        %vm280 = vcmp.ne.f32.partialorder %v260, 0.0
        %vm281 = vcmp.ne.f32.partialorder %v263, 0.0
        %vm282 = vcmp.ne.f32.partialorder %v266, 0.0
        %vm283 = vcmp.ne.f32.partialorder %v269, 0.0
        %vm284 = vcmp.ne.f32.partialorder %v272, 0.0
        %vm285 = vcmp.ne.f32.partialorder %v275, 0.0
        %vm286 = vcmp.ne.f32.partialorder %v278, 0.0
        %v287 = vsel %vm279, 1, 0
        %v288 = vsel %vm280, 1, 0
        %v289 = vsel %vm281, 1, 0
        %v290 = vsel %vm282, 1, 0
        %v291 = vsel %vm283, 1, 0
        %v292 = vsel %vm284, 1, 0
        %v293 = vsel %vm285, 1, 0
        %v294 = vsel %vm286, 1, 0
        %v295 = vcvt.s32.f32 %v287
        %v296 = vcvt.s32.f32 %v288
        %v297 = vcvt.s32.f32 %v289
        %v298 = vcvt.s32.f32 %v290
        %v299 = vcvt.s32.f32 %v291
        %v300 = vcvt.s32.f32 %v292
        %v301 = vcvt.s32.f32 %v293
        %v302 = vcvt.s32.f32 %v294
        %v311 = vlaneseq
        %v312 = vand.u32 %v311, 127
        %v313 = vlaneseq
        %v314 = vshrl.u32 %v313, 7
        %v315 = vsub.s32 %v312, %v314
        %v316 = vrot.slane %v295, %v315
        %v317 = vlaneseq
        %v318 = vshrl.u32 %v317, 7
        %v319 = vsub.s32 %v312, %v318
        %v320 = vrot.slane %v296, %v319
        %v321 = vlaneseq
        %v322 = vshrl.u32 %v321, 7
        %v323 = vsub.s32 %v312, %v322
        %v324 = vrot.slane %v297, %v323
        %v325 = vlaneseq
        %v326 = vshrl.u32 %v325, 7
        %v327 = vsub.s32 %v312, %v326
        %v328 = vrot.slane %v298, %v327
        %v329 = vlaneseq
        %v330 = vshrl.u32 %v329, 7
        %v331 = vsub.s32 %v312, %v330
        %v332 = vrot.slane %v299, %v331
        %v333 = vlaneseq
        %v334 = vshrl.u32 %v333, 7
        %v335 = vsub.s32 %v312, %v334
        %v336 = vrot.slane %v300, %v335
        %v337 = vlaneseq
        %v338 = vshrl.u32 %v337, 7
        %v339 = vsub.s32 %v312, %v338
        %v340 = vrot.slane %v301, %v339
        %v341 = vlaneseq
        %v342 = vshrl.u32 %v341, 7
        %v343 = vsub.s32 %v312, %v342
        %v344 = vrot.slane %v302, %v343
        %vm345 = vcmask 1041409
        %v346 = vsel %vm345, %v320, %v316
        %vm347 = vcmask 1042434
        %v348 = vsel %vm347, %v324, %v346
        %vm349 = vcmask 1043459
        %v350 = vsel %vm349, %v328, %v348
        %vm351 = vcmask 1044484
        %v352 = vsel %vm351, %v332, %v350
        %vm353 = vcmask 1045509
        %v354 = vsel %vm353, %v336, %v352
        %vm355 = vcmask 1046534
        %v356 = vsel %vm355, %v340, %v354
        %vm357 = vcmask 1047559
        %v358 = vsel %vm357, %v344, %v356
        %vm360 = vcmask 64512
        %v361 = vsel %vm360, %v358, 0.0
        %362 = vadd.xlane.f32.xlu0 %v361
        %v363 = vpop.xlane.xlu0 %362
        %v364 = vadd.f32 %v363, 1e-12
        %v365 = vrot.slane %v255, 4
        %v366 = vadd.f32 %v255, %v365
        %v367 = vrot.slane %v366, 2
        %v368 = vadd.f32 %v366, %v367
        %v369 = vrot.slane %v368, 1
        %v370 = vadd.f32 %v368, %v369
        %v371 = vrot.slane %v258, 4
        %v372 = vadd.f32 %v258, %v371
        %v373 = vrot.slane %v372, 2
        %v374 = vadd.f32 %v372, %v373
        %v375 = vrot.slane %v374, 1
        %v376 = vadd.f32 %v374, %v375
        %v377 = vrot.slane %v261, 4
        %v378 = vadd.f32 %v261, %v377
        %v379 = vrot.slane %v378, 2
        %v380 = vadd.f32 %v378, %v379
        %v381 = vrot.slane %v380, 1
        %v382 = vadd.f32 %v380, %v381
        %v383 = vrot.slane %v264, 4
        %v384 = vadd.f32 %v264, %v383
        %v385 = vrot.slane %v384, 2
        %v386 = vadd.f32 %v384, %v385
        %v387 = vrot.slane %v386, 1
        %v388 = vadd.f32 %v386, %v387
        %v389 = vrot.slane %v267, 4
        %v390 = vadd.f32 %v267, %v389
        %v391 = vrot.slane %v390, 2
        %v392 = vadd.f32 %v390, %v391
        %v393 = vrot.slane %v392, 1
        %v394 = vadd.f32 %v392, %v393
        %v395 = vrot.slane %v270, 4
        %v396 = vadd.f32 %v270, %v395
        %v397 = vrot.slane %v396, 2
        %v398 = vadd.f32 %v396, %v397
        %v399 = vrot.slane %v398, 1
        %v400 = vadd.f32 %v398, %v399
        %v401 = vrot.slane %v273, 4
        %v402 = vadd.f32 %v273, %v401
        %v403 = vrot.slane %v402, 2
        %v404 = vadd.f32 %v402, %v403
        %v405 = vrot.slane %v404, 1
        %v406 = vadd.f32 %v404, %v405
        %v407 = vrot.slane %v276, 4
        %v408 = vadd.f32 %v276, %v407
        %v409 = vrot.slane %v408, 2
        %v410 = vadd.f32 %v408, %v409
        %v411 = vrot.slane %v410, 1
        %v412 = vadd.f32 %v410, %v411
        %v414 = vrot.slane %v364, 1
        %v415 = vrot.slane %v364, 2
        %v416 = vrot.slane %v364, 3
        %v417 = vrot.slane %v364, 4
        %v418 = vrot.slane %v364, 5
        %v419 = vrot.slane %v364, 6
        %v420 = vrot.slane %v364, 7
        %v429 = vrcp.pop %v364
        %v430 = vmul.f32 %v370, %v429
        %v431 = vrcp.pop %v414
        %v432 = vmul.f32 %v376, %v431
        %v433 = vrcp.pop %v415
        %v434 = vmul.f32 %v382, %v433
        %v435 = vrcp.pop %v416
        %v436 = vmul.f32 %v388, %v435
        %v437 = vrcp.pop %v417
        %v438 = vmul.f32 %v394, %v437
        %v439 = vrcp.pop %v418
        %v440 = vmul.f32 %v400, %v439
        %v441 = vrcp.pop %v419
        %v442 = vmul.f32 %v406, %v441
        %v443 = vrcp.pop %v420
        %v444 = vmul.f32 %v412, %v443
        %v453 = vrot.slane %v432, 7
        %v454 = vsel %vm345, %v453, %v430
        %v455 = vrot.slane %v434, 6
        %v456 = vsel %vm347, %v455, %v454
        %v457 = vrot.slane %v436, 5
        %v458 = vsel %vm349, %v457, %v456
        %v459 = vrot.slane %v438, 4
        %v460 = vsel %vm351, %v459, %v458
        %v461 = vrot.slane %v440, 3
        %v462 = vsel %vm353, %v461, %v460
        %v463 = vrot.slane %v442, 2
        %v464 = vsel %vm355, %v463, %v462
        %v465 = vrot.slane %v444, 1
        %v466 = vsel %vm357, %v465, %v464
        %v467 = vsel %vm254, %v466, 0
        %469 = vmatprep.subr.mxu0 0.0
        %470 = vmatpush1.msra.mxu0 0.0
        %471 = vmatprep.subr.mxu0 0.0
        %472 = vmatpush1.msra.mxu0 0.0
        %473 = vmatprep.subr.mxu0 0.0
        %474 = vmatpush1.msra.mxu0 0.0
        %475 = vmatprep.subr.mxu0 0.0
        %476 = vmatpush1.msra.mxu0 0.0
        %477 = vmatprep.subr.mxu0 0.0
        %478 = vmatpush1.msra.mxu0 0.0
        %479 = vmatprep.subr.mxu0 0.0
        %480 = vmatpush1.msra.mxu0 0.0
        %481 = vmatprep.subr.mxu0 0.0
        %482 = vmatpush1.msra.mxu0 0.0
        %483 = vmatprep.subr.mxu0 0.0
        %484 = vmatpush1.msra.mxu0 0.0
        %485 = vmatprep.subr.mxu0 0.0
        %486 = vmatpush1.msra.mxu0 0.0
        %487 = vmatprep.subr.mxu0 0.0
        %488 = vmatpush1.msra.mxu0 0.0
        %489 = vmatprep.subr.mxu0 0.0
        %490 = vmatpush1.msra.mxu0 0.0
        %491 = vmatprep.subr.mxu0 0.0
        %492 = vmatpush1.msra.mxu0 0.0
        %493 = vmatprep.subr.mxu0 0.0
        %494 = vmatpush1.msra.mxu0 %v253
        %495 = vmatprep.subr.mxu0 0.0
        %496 = vmatpush1.msra.mxu0 %v252
        %497 = vmatprep.subr.mxu0 0.0
        %498 = vmatpush1.msra.mxu0 %v251
        %499 = vmatprep.subr.mxu0 0.0
        %500 = vmatpush1.msra.mxu0 %v250
        %501 = vmatprep.subr.mxu0 0.0
        %502 = vmatpush2.msra.mxu0 0.0
        %503 = vmatprep.subr.mxu0 0.0
        %504 = vmatpush2.msra.mxu0 0.0
        %505 = vmatprep.subr.mxu0 0.0
        %506 = vmatpush2.msra.mxu0 0.0
        %507 = vmatprep.subr.mxu0 0.0
        %508 = vmatpush2.msra.mxu0 0.0
        %509 = vmatprep.subr.mxu0 0.0
        %510 = vmatpush2.msra.mxu0 0.0
        %511 = vmatprep.subr.mxu0 0.0
        %512 = vmatpush2.msra.mxu0 0.0
        %513 = vmatprep.subr.mxu0 0.0
        %514 = vmatpush2.msra.mxu0 0.0
        %515 = vmatprep.subr.mxu0 0.0
        %516 = vmatpush2.msra.mxu0 0.0
        %517 = vmatprep.subr.mxu0 0.0
        %518 = vmatpush2.msra.mxu0 0.0
        %519 = vmatprep.subr.mxu0 0.0
        %520 = vmatpush2.msra.mxu0 0.0
        %521 = vmatprep.subr.mxu0 0.0
        %522 = vmatpush2.msra.mxu0 0.0
        %523 = vmatprep.subr.mxu0 0.0
        %524 = vmatpush2.msra.mxu0 0.0
        %525 = vmatprep.subr.mxu0 0.0
        %526 = vmatpush2.msra.mxu0 0.0
        %527 = vmatprep.subr.mxu0 0.0
        %528 = vmatpush2.msra.mxu0 0.0
        %529 = vmatprep.subr.mxu0 0.0
        %530 = vmatpush2.msra.mxu0 0.0
        %531 = vmatprep.subr.mxu0 0.0
        %532 = vmatpush2.msra.mxu0 0.0
        %533 = vmatprep.mubr.f32.mxu0 0.0
        %534 = vmatmul.mubr.f32.gmra.mxu0 %v467
        %v535 = vpop.f32.mrf.mxu0
        %v536 = vadd.f32 0.0, %v535
        %v537 = vpop.f32.mrf.mxu0
        %538 = vdwg.mxu0
        %v539 = vmul.f32 %v249, 0.5
        %v540 = vmul.f32 %v536, 0.5
        %v541 = vadd.f32 %v539, %v540
        %542 = vst.msk [vmem:[%s239] sm:$0xff] %vm254, %v541
        %s543 = sand.u32 %s104, 1
        %s544 = scalar_lea.sflag [#allocation4], %s543
        %s545 = sand.u32 %s104, 1
        %s546 = smul.addr %s545, 8
        %s547 = scalar_lea.vmem [#allocation8], %s546
        // Predicated region
        $region45: #{tpu_custom_call.1} parent=31 // pred_check
          %p548 = pneg %p114
        $region46: #{tpu_custom_call.1} parent=31 // pred_check_branch
          %550 = sbr.rel (%p548) target = $region48
        $region47: #{tpu_custom_call.1} parent=31 // pred_region
          %s552 = ssub.s32 128, 128
          %553 = vsyncadd %s544, %s552
          %s554 = smul.addr %s23, 128
          %s555 = scalar_lea.hbm %s3, %s554
          %s557 = sshll.u32 %s547, 4
          %s558 = int_to_ptr.vmem [resolvable:$true] %s557
          %560 = dma.vmem_to_hbm [thread:$0]  %s558, 128, %s555, %s544
        $region48: #{tpu_custom_call.1} parent=31 // pred_fallthru
          _
      $region32: #{tpu_custom_call.1} parent=5 // pred_fallthru
        _
      %p561 = scmp.le.s32.totalorder 2, %s18
      // Predicated region
      $region49: #{tpu_custom_call.1} parent=5 // pred_check
        %p562 = pneg %p561
      $region50: #{tpu_custom_call.1} parent=5 // pred_check_branch
        %564 = sbr.rel (%p562) target = $region52
      $region51: #{tpu_custom_call.1} parent=5 // pred_region
        %s565 = ssub.s32 %s18, 2
        // Predicated region
        $region53: #{tpu_custom_call.1} parent=51 // pred_check
          %p566 = pneg %p120
        $region54: #{tpu_custom_call.1} parent=51 // pred_check_branch
          %568 = sbr.rel (%p566) target = $region56
        $region55: #{tpu_custom_call.1} parent=51 // pred_region
          %s569 = sand.u32 %s105, 1
          %s570 = scalar_lea.sflag [#allocation4], %s569
          %s571 = sand.u32 %s105, 1
          %s572 = smul.addr %s571, 8
          %s573 = scalar_lea.vmem [#allocation8], %s572
          %574 = dma.done %s570, 128
        $region56: #{tpu_custom_call.1} parent=51 // pred_fallthru
          _
      $region52: #{tpu_custom_call.1} parent=5 // pred_fallthru
        _
    $region6: #{tpu_custom_call.1} parent=1 // loop_footer
      %s22 = sadd.s32 1, %s18
    $region7: #{tpu_custom_call.1} parent=1 // loop_footer_branch
      %17 = sbr.rel target = $region3
    $region8: #{tpu_custom_call.1} parent=1 // loop_exit
      _
    %575 = vsyncpa [#allocation3], 1
    %s576 = scalar_lea.sflag [#allocation3], 1
    %577 = vsyncpa %s576, 1
    %578 = vsyncpa [#allocation6], 1
    %s579 = scalar_lea.sflag [#allocation6], 1
    %580 = vsyncpa %s579, 1
    %581 = vsyncpa [#allocation4], 1
    %s582 = scalar_lea.sflag [#allocation4], 1
    %583 = vsyncpa %s582, 1

</llo_original>
